<compile_context>
chip_gen: v7x
topology: tpu7x:2x2x1
jax: 0.10.0
libtpu: 0.0.40
codegen_flags: <defaults>
</compile_context>

<pallas_src>
import functools

import jax
import jax.numpy as jnp
from jax.experimental import pallas as pl
from jax.experimental.pallas import tpu as pltpu


# --------------------------------------------------------------------------- #
# Kernels
# --------------------------------------------------------------------------- #
def _pool_kernel(x_ref, pooled_ref, *, inv_hw):
    """Global average pool: accumulate f32 partial sums over HW tiles."""
    h = pl.program_id(2)

    @pl.when(h == 0)
    def _():
        pooled_ref[...] = jnp.zeros_like(pooled_ref)

    # f32-accumulating spatial sum of the current (1, TC, THW) block.
    pooled_ref[...] += jnp.sum(
        x_ref[...].astype(jnp.float32), axis=-1, keepdims=True)

    @pl.when(h == pl.num_programs(2) - 1)
    def _():
        pooled_ref[...] *= jnp.float32(inv_hw)


def _gate_kernel(pooled_ref, w1t_ref, b1_ref, w2t_ref, b2_ref, gate_ref):
    """Squeeze/excite FCs batched over B: (B,C)@(C,Cr) -> ReLU -> (B,Cr)@(Cr,C) -> sigmoid."""
    se = pooled_ref[...]                                     # (B, C) f32
    h = jnp.dot(se, w1t_ref[...].astype(jnp.float32),
                preferred_element_type=jnp.float32)          # (B, Cr)
    h = jnp.maximum(h + b1_ref[...].astype(jnp.float32), 0.0)  # ReLU
    g = jnp.dot(h, w2t_ref[...].astype(jnp.float32),
                preferred_element_type=jnp.float32)          # (B, C)
    g = g + b2_ref[...].astype(jnp.float32)
    gate_ref[...] = jax.nn.sigmoid(g).astype(gate_ref.dtype)


def _scale_kernel(x_ref, gate_ref, o_ref):
    """Elementwise x * gate (gate broadcast over the spatial/lane axis)."""
    # x_ref: (1, TC, THW), gate_ref: (1, TC, 1) in x dtype -> no f32 widening.
    o_ref[...] = (x_ref[...] * gate_ref[...]).astype(o_ref.dtype)


# --------------------------------------------------------------------------- #
# Tiling helpers
# --------------------------------------------------------------------------- #
def _pick_spatial_tile(hw):
    # Lane axis: must be a multiple of 128 or the full extent.
    for cand in (2048, 1024, 512, 256, 128):
        if hw % cand == 0:
            return cand
    return hw  # full extent is always legal


def _pick_channel_tile(c, thw, itemsize, budget_bytes=2 << 20):
    # Sublane axis: must be a multiple of 8 or the full extent.
    for cand in (1024, 512, 256, 128, 64, 32, 16, 8):
        if c % cand == 0 and cand * thw * itemsize <= budget_bytes:
            return cand
    return c  # full extent is always legal


# --------------------------------------------------------------------------- #
# Public wrapper
# --------------------------------------------------------------------------- #
def channel_attention_pallas(x_nchw, w_reduce, b_reduce, w_expand, b_expand):
    """x_nchw: (B, C, H, W); w_reduce: (Cr, C, 1, 1); w_expand: (C, Cr, 1, 1)."""
    B, C, H, W = x_nchw.shape
    Cr = w_reduce.shape[0]
    HW = H * W
    dtype = x_nchw.dtype
    itemsize = jnp.dtype(dtype).itemsize

    # Free (contiguous) reshape: NCHW kept, spatial flattened onto the lane axis.
    x = x_nchw.reshape(B, C, HW)

    thw = _pick_spatial_tile(HW)
    tc = _pick_channel_tile(C, thw, itemsize)
    n_c = C // tc
    n_hw = HW // thw

    # Explicit VMEM budget: double-buffered in + out tiles (f32 headroom) + slack.
    tile_bytes = tc * thw * max(itemsize, 4)
    vmem_limit = int(min(64 << 20, max(16 << 20, 4 * tile_bytes + (4 << 20))))

    # Pre-transpose 1x1-conv weights to (in, out); biases as 2D rows.
    w1t = w_reduce.reshape(Cr, C).T      # (C, Cr)
    b1 = b_reduce.reshape(1, Cr)
    w2t = w_expand.reshape(C, Cr).T      # (Cr, C)
    b2 = b_expand.reshape(1, C)

    # ---- Phase 1: global average pool (tiled spatial reduction) -------------
    pooled3 = pl.pallas_call(
        functools.partial(_pool_kernel, inv_hw=1.0 / HW),
        out_shape=jax.ShapeDtypeStruct((B, C, 1), jnp.float32),
        grid_spec=pltpu.PrefetchScalarGridSpec(
            num_scalar_prefetch=0,
            grid=(B, n_c, n_hw),
            in_specs=[pl.BlockSpec((1, tc, thw), lambda b, c, h: (b, c, h))],
            out_specs=pl.BlockSpec((1, tc, 1), lambda b, c, h: (b, c, 0)),
        ),
        compiler_params=pltpu.CompilerParams(
            dimension_semantics=("parallel", "parallel", "arbitrary"),
            vmem_limit_bytes=vmem_limit),
    )(x)
    pooled = pooled3.reshape(B, C)       # free reshape (contiguous)

    # ---- Phase 2: squeeze/excite FCs + sigmoid, batched over B ---------------
    gate = pl.pallas_call(
        _gate_kernel,
        out_shape=jax.ShapeDtypeStruct((B, C), dtype),
    )(pooled, w1t, b1, w2t, b2)
    gate3 = gate.reshape(B, C, 1)        # free reshape (contiguous)

    # ---- Phase 3: elementwise scale, fully parallel tiled grid ---------------
    out = pl.pallas_call(
        _scale_kernel,
        out_shape=jax.ShapeDtypeStruct((B, C, HW), dtype),
        grid_spec=pltpu.PrefetchScalarGridSpec(
            num_scalar_prefetch=0,
            grid=(B, n_c, n_hw),
            in_specs=[
                pl.BlockSpec((1, tc, thw), lambda b, c, h: (b, c, h)),
                pl.BlockSpec((1, tc, 1), lambda b, c, h: (b, c, 0)),
            ],
            out_specs=pl.BlockSpec((1, tc, thw), lambda b, c, h: (b, c, h)),
        ),
        compiler_params=pltpu.CompilerParams(
            dimension_semantics=("parallel", "parallel", "parallel"),
            vmem_limit_bytes=vmem_limit),
    )(x, gate3)

    return out.reshape(B, C, H, W)


# --------------------------------------------------------------------------- #
# Pure-JAX reference mirroring the PyTorch forward
# --------------------------------------------------------------------------- #
def channel_attention_ref(x_nchw, w_reduce, b_reduce, w_expand, b_expand):
    B, C, H, W = x_nchw.shape
    Cr = w_reduce.shape[0]
    x = x_nchw.astype(jnp.float32)
    se = jnp.mean(x, axis=(2, 3))                         # AdaptiveAvgPool2d(1)
    h = se @ w_reduce.reshape(Cr, C).T + b_reduce         # Conv2d(C, Cr, 1)
    h = jnp.maximum(h, 0.0)                               # ReLU
    g = h @ w_expand.reshape(C, Cr).T + b_expand          # Conv2d(Cr, C, 1)
    gate = jax.nn.sigmoid(g)                              # Sigmoid
    return (x * gate[:, :, None, None]).astype(x_nchw.dtype)


if __name__ == "__main__":
    B, C, H, W = 2, 32, 16, 16
    squeeze_factor = 16
    Cr = C // squeeze_factor  # 2

    key = jax.random.PRNGKey(0)
    kx, k1, k2, k3, k4 = jax.random.split(key, 5)

    x = jax.random.normal(kx, (B, C, H, W), dtype=jnp.float32)
    # Synthetic parameters with Conv2d 1x1 weight/bias shapes.
    w_reduce = jax.random.normal(k1, (Cr, C, 1, 1), dtype=jnp.float32) * 0.5
    b_reduce = jax.random.normal(k2, (Cr,), dtype=jnp.float32) * 0.1
    w_expand = jax.random.normal(k3, (C, Cr, 1, 1), dtype=jnp.float32) * 0.5
    b_expand = jax.random.normal(k4, (C,), dtype=jnp.float32) * 0.1

    out = channel_attention_pallas(x, w_reduce, b_reduce, w_expand, b_expand)
    out = jax.block_until_ready(out)

    ref = channel_attention_ref(x, w_reduce, b_reduce, w_expand, b_expand)
    assert out.shape == (B, C, H, W)
    assert jnp.allclose(out, ref, rtol=1e-5, atol=1e-5), float(
        jnp.max(jnp.abs(out - ref)))

    print("KERNEL_OK")
</pallas_src>

<mosaic_0001>
module attributes {stable_mosaic.version = 11 : i64} {
  func.func @_pool_kernel(%arg0: i32, %arg1: i32, %arg2: i32, %arg3: memref<1x32x256xf32, #tpu.memory_space<vmem>>, %arg4: memref<1x32x1xf32, #tpu.memory_space<vmem>>) attributes {dimension_semantics = [#tpu.dimension_semantics<parallel>, #tpu.dimension_semantics<parallel>, #tpu.dimension_semantics<arbitrary>], iteration_bounds = array<i64: 2, 1, 1>, scalar_prefetch = 0 : i64, scratch_operands = 0 : i64, tpu.core_type = #tpu.core_type<tc>, window_params = [{transform_indices = @transform_0, window_bounds = array<i64: 1, 32, 256>}, {transform_indices = @transform_1, window_bounds = array<i64: 1, 32, 1>}]} {
    %c0_i32 = arith.constant 0 : i32
    %0 = arith.cmpi eq, %arg2, %c0_i32 : i32
    %1 = arith.extui %0 : i1 to i32
    %c0_i32_0 = arith.constant 0 : i32
    %2 = arith.cmpi ne, %1, %c0_i32_0 : i32
    scf.if %2 {
      %cst_11 = arith.constant 0.000000e+00 : f32
      %12 = vector.broadcast %cst_11 : f32 to vector<1x32x1xf32>
      %c0_12 = arith.constant 0 : index
      %c0_13 = arith.constant 0 : index
      %c0_14 = arith.constant 0 : index
      %13 = vector.load %arg4[%c0_12, %c0_13, %c0_14] : memref<1x32x1xf32, #tpu.memory_space<vmem>>, vector<1x32x1xf32>
      tpu.vector_store %arg4[%c0_12, %c0_13, %c0_14], %12 {strides = array<i32>} : memref<1x32x1xf32, #tpu.memory_space<vmem>>, vector<1x32x1xf32>,
    } else {
    }
    %c0 = arith.constant 0 : index
    %c0_1 = arith.constant 0 : index
    %c0_2 = arith.constant 0 : index
    %3 = vector.load %arg4[%c0, %c0_1, %c0_2] : memref<1x32x1xf32, #tpu.memory_space<vmem>>, vector<1x32x1xf32>
    %c0_3 = arith.constant 0 : index
    %c0_4 = arith.constant 0 : index
    %c0_5 = arith.constant 0 : index
    %4 = vector.load %arg3[%c0_3, %c0_4, %c0_5] : memref<1x32x256xf32, #tpu.memory_space<vmem>>, vector<1x32x256xf32>
    %cst = arith.constant dense<0.000000e+00> : vector<1x32xf32>
    %5 = vector.multi_reduction <add>, %4, %cst [2] : vector<1x32x256xf32> to vector<1x32xf32>
    %6 = vector.shape_cast %5 : vector<1x32xf32> to vector<1x32x1xf32>
    %7 = arith.addf %3, %6 : vector<1x32x1xf32>
    %c0_6 = arith.constant 0 : index
    %c0_7 = arith.constant 0 : index
    %c0_8 = arith.constant 0 : index
    %8 = vector.load %arg4[%c0_6, %c0_7, %c0_8] : memref<1x32x1xf32, #tpu.memory_space<vmem>>, vector<1x32x1xf32>
    tpu.vector_store %arg4[%c0_6, %c0_7, %c0_8], %7 {strides = array<i32>} : memref<1x32x1xf32, #tpu.memory_space<vmem>>, vector<1x32x1xf32>,
    %c0_i32_9 = arith.constant 0 : i32
    %9 = arith.cmpi eq, %arg2, %c0_i32_9 : i32
    %10 = arith.extui %9 : i1 to i32
    %c0_i32_10 = arith.constant 0 : i32
    %11 = arith.cmpi ne, %10, %c0_i32_10 : i32
    scf.if %11 {
      %c0_11 = arith.constant 0 : index
      %c0_12 = arith.constant 0 : index
      %c0_13 = arith.constant 0 : index
      %12 = vector.load %arg4[%c0_11, %c0_12, %c0_13] : memref<1x32x1xf32, #tpu.memory_space<vmem>>, vector<1x32x1xf32>
      %cst_14 = arith.constant 3.906250e-03 : f32
      %13 = vector.broadcast %cst_14 : f32 to vector<1x32x1xf32>
      %14 = arith.mulf %12, %13 : vector<1x32x1xf32>
      %c0_15 = arith.constant 0 : index
      %c0_16 = arith.constant 0 : index
      %c0_17 = arith.constant 0 : index
      %15 = vector.load %arg4[%c0_15, %c0_16, %c0_17] : memref<1x32x1xf32, #tpu.memory_space<vmem>>, vector<1x32x1xf32>
      tpu.vector_store %arg4[%c0_15, %c0_16, %c0_17], %14 {strides = array<i32>} : memref<1x32x1xf32, #tpu.memory_space<vmem>>, vector<1x32x1xf32>,
    } else {
    }
    return
  }
  func.func @transform_0(%arg0: i32, %arg1: i32, %arg2: i32) -> (i32, i32, i32) {
    %c0_i32 = arith.constant 0 : i32
    return %arg0, %arg1, %arg2 : i32, i32, i32
  }
  func.func @transform_1(%arg0: i32, %arg1: i32, %arg2: i32) -> (i32, i32, i32) {
    %c0_i32 = arith.constant 0 : i32
    %c0_i32_0 = arith.constant 0 : i32
    return %arg0, %arg1, %c0_i32 : i32, i32, i32
  }
}

</mosaic_0001>

<llo_original>
// kernel: tpu_custom_call.1
$region0: #{tpu_custom_call.1}
  #allocation0 [shape = 'u32[]', space=smem, size = 0x4, offset = 0x4, fixed_abs, tag = 'smem constant byte address 0x4 - core index']
  #allocation1 [shape = 'u32[144,128]{1,0:T(1,128)}', space=vmem, size = 0x12000, scoped, tag = 'internal scratch']
  %s0 = inlined_call_operand.hbm [shape: f32[2,32,256], index: 0, kind: input, shape index: {}]
  %s1 = inlined_call_operand.vmem [shape: f32[2,32,1], index: 1, kind: output, shape index: {}]
  %s2 = sld [smem:[#allocation0]]
  $region49: #{tpu_custom_call.1} parent=0
    _
  %s4 = ssub.s32 1, %s2
  %s5 = scalar_select 0, %s4, %s2
  $region1: #{tpu_custom_call.1} parent=0
    #allocation2 [shape = 'u8[65536]{0}', space=vmem, size = 0x10000, scoped, tag = 'input window, operand 0']
    #allocation3 [shape = 's32[2]{0}', space=sflag, size = 0x8, scoped, tag = 'scoped memory for tpu_custom_call.1']
    %6 = vsyncpa [#allocation3], 0
    %s7 = scalar_lea.sflag [#allocation3], 1
    %8 = vsyncpa %s7, 0
    loop: start=0, step=1, limit=4
    $region2: #{tpu_custom_call.1} parent=1 // loop_pre_header
      _
    $region3: #{tpu_custom_call.1} parent=1 // loop_header
      %s10 = sphi 0, %s14
      %p11 = scmp.ge.s32.totalorder %s10, 4
      %s17 = sphi 0, %s36
      %s18 = sphi 0, %s32
      %s19 = sphi 0, %s28
      %s20 = sphi 0, %s17
      %s21 = sphi 0, %s18
      %s22 = sphi 0, %s19
      %s23 = sphi 0, %s20
      %s24 = sphi 0, %s21
      %s25 = sphi 0, %s22
      %s43 = sphi 0, %s45
      %s46 = sphi 0, %s43
      %s47 = sphi 0, %s46
      %s63 = sphi 0, %s47
      %s71 = sphi 0, %s73
      %s74 = sphi 0, %s71
      %s75 = sphi 0, %s74
      %s91 = sphi 0, %s75
    $region4: #{tpu_custom_call.1} parent=1 // loop_header_branch
      %13 = sbr.rel (%p11) target = $region8
    $region5: #{tpu_custom_call.1} parent=1 // loop_body
      %s15 = ssub.s32 %s10, 1
      %s16 = ssub.s32 %s10, 2
      %s26 = sadd.s32 1, %s19
      %p27 = scmp.ge.s32.totalorder %s26, 1
      %s28 = scalar_select %p27, 0, %s26
      %s29 = sadd.s32 1, %s18
      %s30 = scalar_select %p27, %s29, %s18
      %p31 = scmp.ge.s32.totalorder %s30, 1
      %s32 = scalar_select %p31, 0, %s30
      %s33 = sadd.s32 1, %s17
      %s34 = scalar_select %p31, %s33, %s17
      %p35 = scmp.ge.s32.totalorder %s34, 2
      %s36 = scalar_select %p35, 0, %s34
      %s37 = ssub.s32 %s17, %s36
      %s38 = ssub.s32 %s18, %s32
      %s39 = sor.u32 %s37, %s38
      %s40 = ssub.s32 %s19, %s28
      %s41 = sor.u32 %s39, %s40
      %p42 = scmp.eq.s32.totalorder %s41, 0
      %s44 = sadd.s32 %s43, 1
      %s45 = scalar_select %p42, %s43, %s44
      %p48 = pneg %p42
      %p49 = scmp.eq.s32.totalorder %s10, 1
      %p50 = por %p48, %p49
      %p51 = scmp.ne.s32.totalorder %s43, %s46
      %p52 = scmp.eq.s32.totalorder %s10, 0
      %p53 = por %p51, %p52
      %p54 = scmp.ne.s32.totalorder %s43, %s46
      %p55 = scmp.eq.s32.totalorder %s15, 1
      %p56 = por %p54, %p55
      %p57 = scmp.ne.s32.totalorder %s46, %s47
      %p58 = scmp.eq.s32.totalorder %s15, 0
      %p59 = por %p57, %p58
      %p60 = scmp.ne.s32.totalorder %s46, %s47
      %p61 = scmp.eq.s32.totalorder %s16, 1
      %p62 = por %p60, %p61
      %p64 = scmp.ne.s32.totalorder %s47, %s63
      %p65 = scmp.eq.s32.totalorder %s16, 0
      %p66 = por %p64, %p65
      %s67 = ssub.s32 %s17, %s36
      %s68 = ssub.s32 %s18, %s32
      %s69 = sor.u32 %s67, %s68
      %p70 = scmp.eq.s32.totalorder %s69, 0
      %s72 = sadd.s32 %s71, 1
      %s73 = scalar_select %p70, %s71, %s72
      %p76 = pneg %p70
      %p77 = scmp.eq.s32.totalorder %s10, 1
      %p78 = por %p76, %p77
      %p79 = scmp.ne.s32.totalorder %s71, %s74
      %p80 = scmp.eq.s32.totalorder %s10, 0
      %p81 = por %p79, %p80
      %p82 = scmp.ne.s32.totalorder %s71, %s74
      %p83 = scmp.eq.s32.totalorder %s15, 1
      %p84 = por %p82, %p83
      %p85 = scmp.ne.s32.totalorder %s74, %s75
      %p86 = scmp.eq.s32.totalorder %s15, 0
      %p87 = por %p85, %p86
      %p88 = scmp.ne.s32.totalorder %s74, %s75
      %p89 = scmp.eq.s32.totalorder %s16, 1
      %p90 = por %p88, %p89
      %p92 = scmp.ne.s32.totalorder %s75, %s91
      %p93 = scmp.eq.s32.totalorder %s16, 0
      %p94 = por %p92, %p93
      %p95 = scmp.le.s32.totalorder 1, %s10
      %p96 = scmp.lt.s32.totalorder %s10, 3
      %p97 = pnand %p95, %p96
      %p98 = pneg %p97
      // Predicated region
      $region9: #{tpu_custom_call.1} parent=5 // pred_check
        _
      $region10: #{tpu_custom_call.1} parent=5 // pred_check_branch
        %100 = sbr.rel (%p97) target = $region12
      $region11: #{tpu_custom_call.1} parent=5 // pred_region
        %s101 = ssub.s32 %s10, 1
      $region12: #{tpu_custom_call.1} parent=5 // pred_fallthru
        _
      %p102 = scmp.lt.s32.totalorder %s10, 2
      // Predicated region
      $region13: #{tpu_custom_call.1} parent=5 // pred_check
        %p103 = pneg %p102
      $region14: #{tpu_custom_call.1} parent=5 // pred_check_branch
        %105 = sbr.rel (%p103) target = $region16
      $region15: #{tpu_custom_call.1} parent=5 // pred_region
        // Predicated region
        $region17: #{tpu_custom_call.1} parent=15 // pred_check
          %p106 = pneg %p53
        $region18: #{tpu_custom_call.1} parent=15 // pred_check_branch
          %108 = sbr.rel (%p106) target = $region20
        $region19: #{tpu_custom_call.1} parent=15 // pred_region
          %s109 = sand.u32 %s43, 1
          %s110 = scalar_lea.sflag [#allocation3], %s109
          %s111 = sand.u32 %s43, 1
          %s112 = smul.addr %s111, 64
          %s113 = scalar_lea.vmem [#allocation2], %s112
          %s114 = smul.u32 4, %s18
          %s115 = smul.u32 2, %s19
          %s117 = ssub.s32 1024, 1024
          %118 = vsyncadd %s110, %s117
          %s119 = smul.addr %s114, 2
          %s120 = sadd.s32 %s115, %s119
          %s121 = smul.addr %s17, 8
          %s122 = sadd.s32 %s120, %s121
          %s123 = smul.addr %s122, 128
          %s124 = scalar_lea.hbm %s0, %s123
          %s125 = sshll.u32 %s113, 4
          %s126 = int_to_ptr.vmem [resolvable:$true] %s125
          %131 = dma.hbm_to_vmem [thread:$0]  %s124, 1024, %s126, %s110, 256, 256, 16
        $region20: #{tpu_custom_call.1} parent=15 // pred_fallthru
          _
      $region16: #{tpu_custom_call.1} parent=5 // pred_fallthru
        _
      %p132 = scmp.le.s32.totalorder 1, %s10
      %p133 = scmp.lt.s32.totalorder %s10, 3
      %p134 = pnand %p132, %p133
      %p135 = pneg %p134
      // Predicated region
      $region21: #{tpu_custom_call.1} parent=5 // pred_check
        _
      $region22: #{tpu_custom_call.1} parent=5 // pred_check_branch
        %137 = sbr.rel (%p134) target = $region24
      $region23: #{tpu_custom_call.1} parent=5 // pred_region
        %s138 = ssub.s32 %s10, 1
        %s139 = sand.u32 %s46, 1
        %s140 = scalar_lea.sflag [#allocation3], %s139
        %s141 = sand.u32 %s46, 1
        %s142 = smul.addr %s141, 64
        %s143 = scalar_lea.vmem [#allocation2], %s142
        // Predicated region
        $region25: #{tpu_custom_call.1} parent=23 // pred_check
          %p144 = pneg %p59
        $region26: #{tpu_custom_call.1} parent=23 // pred_check_branch
          %146 = sbr.rel (%p144) target = $region28
        $region27: #{tpu_custom_call.1} parent=23 // pred_region
          %147 = dma.done %s140, 1024
        $region28: #{tpu_custom_call.1} parent=23 // pred_fallthru
          _
        %s148 = sand.u32 %s46, 1
        %s149 = scalar_lea.sflag [#allocation3], %s148
        %s150 = sand.u32 %s46, 1
        %s151 = smul.addr %s150, 64
        %s152 = scalar_lea.vmem [#allocation2], %s151
        %p153 = pneg %p59
        %p154 = pneg %p56
        %p155 = pneg %p87
        %p156 = pneg %p84
        %s157 = smul.u32 4, %s21
        %p158 = scmp.lt.s32.totalorder %s20, 1
        %s159 = scalar_select %p158, %s20, 1
        %p160 = scmp.lt.s32.totalorder %s157, 3
        %s161 = scalar_select %p160, %s157, 3
        %s162 = smul.addr %s159, 4
        %s163 = sadd.s32 %s161, %s162
        %s164 = smul.addr %s163, 8
        %s165 = scalar_lea.vmem %s1, %s164
        %s166 = smul.u32 4, %s21
        %s167 = smul.u32 2, %s22
        %s168 = smul.u32 4, %s21
        %p169 = scmp.lt.s32.totalorder %s20, 1
        %s170 = scalar_select %p169, %s20, 1
        %p171 = scmp.lt.s32.totalorder %s168, 3
        %s172 = scalar_select %p171, %s168, 3
        %s173 = smul.addr %s170, 4
        %s174 = sadd.s32 %s172, %s173
        %s175 = smul.addr %s174, 8
        %s176 = scalar_lea.vmem %s1, %s175
        %s177 = smul.u32 4, %s21
        %p178 = scmp.eq.s32.totalorder %s22, 0
        // Predicated region
        $region29: #{tpu_custom_call.1} parent=23 // pred_check
          %p179 = pneg %p178
        $region30: #{tpu_custom_call.1} parent=23 // pred_check_branch
          %181 = sbr.rel (%p179) target = $region32
        $region31: #{tpu_custom_call.1} parent=23 // pred_region
          %vm182 = vcmask 7168
          %183 = vst.msk [vmem:[%s176] sm:$0xff] %vm182, 0.0
          %184 = vst.msk [vmem:[%s176 + $0x8] sm:$0xff] %vm182, 0.0
          %185 = vst.msk [vmem:[%s176 + $0x10] sm:$0xff] %vm182, 0.0
          %186 = vst.msk [vmem:[%s176 + $0x18] sm:$0xff] %vm182, 0.0
        $region32: #{tpu_custom_call.1} parent=23 // pred_fallthru
          _
        %v187 = vld [vmem:[%s176] sm:$0xff]
        %v188 = vld [vmem:[%s176 + $0x8] sm:$0xff]
        %v189 = vld [vmem:[%s176 + $0x10] sm:$0xff]
        %v190 = vld [vmem:[%s176 + $0x18] sm:$0xff]
        %v191 = vld [vmem:[%s143] sm:$0xff]
        %v192 = vld [vmem:[%s143 + $0x8] sm:$0xff]
        %v193 = vld [vmem:[%s143 + $0x10] sm:$0xff]
        %v194 = vld [vmem:[%s143 + $0x18] sm:$0xff]
        %v195 = vld [vmem:[%s143 + $0x20] sm:$0xff]
        %v196 = vld [vmem:[%s143 + $0x28] sm:$0xff]
        %v197 = vld [vmem:[%s143 + $0x30] sm:$0xff]
        %v198 = vld [vmem:[%s143 + $0x38] sm:$0xff]
        %v199 = vadd.f32 %v191, %v192
        %200 = vadd.xlane.f32.xlu0 %v199
        %v201 = vpop.xlane.xlu0 %200
        %v202 = vadd.f32 %v193, %v194
        %203 = vadd.xlane.f32.xlu0 %v202
        %v204 = vpop.xlane.xlu0 %203
        %v205 = vadd.f32 %v195, %v196
        %206 = vadd.xlane.f32.xlu0 %v205
        %v207 = vpop.xlane.xlu0 %206
        %v208 = vadd.f32 %v197, %v198
        %209 = vadd.xlane.f32.xlu0 %v208
        %v210 = vpop.xlane.xlu0 %209
        %v211 = vadd.f32 %v187, %v201
        %v212 = vadd.f32 %v188, %v204
        %v213 = vadd.f32 %v189, %v207
        %v214 = vadd.f32 %v190, %v210
        %vm215 = vcmask 7168
        %216 = vst.msk [vmem:[%s176] sm:$0xff] %vm215, %v211
        %217 = vst.msk [vmem:[%s176 + $0x8] sm:$0xff] %vm215, %v212
        %218 = vst.msk [vmem:[%s176 + $0x10] sm:$0xff] %vm215, %v213
        %219 = vst.msk [vmem:[%s176 + $0x18] sm:$0xff] %vm215, %v214
        // Predicated region
        $region33: #{tpu_custom_call.1} parent=23 // pred_check
          %p220 = pneg %p178
        $region34: #{tpu_custom_call.1} parent=23 // pred_check_branch
          %222 = sbr.rel (%p220) target = $region36
        $region35: #{tpu_custom_call.1} parent=23 // pred_region
          %v223 = vld [vmem:[%s176] sm:$0xff]
          %v224 = vld [vmem:[%s176 + $0x8] sm:$0xff]
          %v225 = vld [vmem:[%s176 + $0x10] sm:$0xff]
          %v226 = vld [vmem:[%s176 + $0x18] sm:$0xff]
          %v227 = vmul.f32 %v223, 0.00390625
          %v228 = vmul.f32 %v224, 0.00390625
          %v229 = vmul.f32 %v225, 0.00390625
          %v230 = vmul.f32 %v226, 0.00390625
          %231 = vst.msk [vmem:[%s176] sm:$0xff] %vm215, %v227
          %232 = vst.msk [vmem:[%s176 + $0x8] sm:$0xff] %vm215, %v228
          %233 = vst.msk [vmem:[%s176 + $0x10] sm:$0xff] %vm215, %v229
          %234 = vst.msk [vmem:[%s176 + $0x18] sm:$0xff] %vm215, %v230
        $region36: #{tpu_custom_call.1} parent=23 // pred_fallthru
          _
        %s235 = smul.u32 4, %s21
        %p236 = scmp.lt.s32.totalorder %s20, 1
        %s237 = scalar_select %p236, %s20, 1
        %p238 = scmp.lt.s32.totalorder %s235, 3
        %s239 = scalar_select %p238, %s235, 3
        %s240 = smul.addr %s237, 4
        %s241 = sadd.s32 %s239, %s240
        %s242 = smul.addr %s241, 8
        %s243 = scalar_lea.vmem %s1, %s242
        // Predicated region
        $region37: #{tpu_custom_call.1} parent=23 // pred_check
          %p244 = pneg %p84
        $region38: #{tpu_custom_call.1} parent=23 // pred_check_branch
          %246 = sbr.rel (%p244) target = $region40
        $region39: #{tpu_custom_call.1} parent=23 // pred_region
          %s247 = smul.u32 4, %s21
        $region40: #{tpu_custom_call.1} parent=23 // pred_fallthru
          _
      $region24: #{tpu_custom_call.1} parent=5 // pred_fallthru
        _
      %p248 = scmp.le.s32.totalorder 2, %s10
      // Predicated region
      $region41: #{tpu_custom_call.1} parent=5 // pred_check
        %p249 = pneg %p248
      $region42: #{tpu_custom_call.1} parent=5 // pred_check_branch
        %251 = sbr.rel (%p249) target = $region44
      $region43: #{tpu_custom_call.1} parent=5 // pred_region
        %s252 = ssub.s32 %s10, 2
        // Predicated region
        $region45: #{tpu_custom_call.1} parent=43 // pred_check
          %p253 = pneg %p90
        $region46: #{tpu_custom_call.1} parent=43 // pred_check_branch
          %255 = sbr.rel (%p253) target = $region48
        $region47: #{tpu_custom_call.1} parent=43 // pred_region
          %s256 = smul.u32 4, %s24
          %p257 = scmp.lt.s32.totalorder %s23, 1
          %s258 = scalar_select %p257, %s23, 1
          %p259 = scmp.lt.s32.totalorder %s256, 3
          %s260 = scalar_select %p259, %s256, 3
          %s261 = smul.addr %s258, 4
          %s262 = sadd.s32 %s260, %s261
          %s263 = smul.addr %s262, 8
          %s264 = scalar_lea.vmem %s1, %s263
        $region48: #{tpu_custom_call.1} parent=43 // pred_fallthru
          _
      $region44: #{tpu_custom_call.1} parent=5 // pred_fallthru
        _
    $region6: #{tpu_custom_call.1} parent=1 // loop_footer
      %s14 = sadd.s32 1, %s10
    $region7: #{tpu_custom_call.1} parent=1 // loop_footer_branch
      %9 = sbr.rel target = $region3
    $region8: #{tpu_custom_call.1} parent=1 // loop_exit
      _
    %265 = vsyncpa [#allocation3], 1
    %s266 = scalar_lea.sflag [#allocation3], 1
    %267 = vsyncpa %s266, 1

</llo_original>
